<compile_context>
chip_gen: v6e
topology: v6e:2x2x1
jax: 0.10.0
libtpu: 0.0.40
codegen_flags: <defaults>
</compile_context>

<pallas_src>
import functools

import jax
import jax.numpy as jnp
import numpy as np
from jax.experimental import pallas as pl
from jax.experimental.pallas import tpu as pltpu


# ----------------------------------------------------------------------------
# Chip query (host-side, once).
# ----------------------------------------------------------------------------
def _query_vmem_capacity() -> int:
    try:
        info = pltpu.get_tpu_info()
        cap = getattr(info, "vmem_capacity_bytes", None)
        if cap:
            return int(cap)
    except Exception:
        pass
    return 64 * 1024 * 1024  # conservative (v7x-sized VMEM)


_VMEM_CAPACITY = _query_vmem_capacity()
_BIG_VMEM = _VMEM_CAPACITY >= 100 * 1024 * 1024  # v5e/v6e (128 MiB) vs v7x (64 MiB)


def _round_up(x: int, m: int) -> int:
    return -(-x // m) * m


def _resolve_output_size(output_size):
    if isinstance(output_size, int):
        return int(output_size), int(output_size)
    oh, ow = output_size
    return int(oh), int(ow)


# ----------------------------------------------------------------------------
# Pooling-matrix construction (host-side, static shapes).
# ----------------------------------------------------------------------------
def _sum_matrix(in_size: int, out_size: int) -> np.ndarray:
    """0/1 summation matrix A (out_size, in_size): A @ v sums each window."""
    a = np.zeros((out_size, in_size), dtype=np.float32)
    for i in range(out_size):
        start = (i * in_size) // out_size
        end = -(-((i + 1) * in_size) // out_size)  # ceil
        a[i, start:end] = 1.0
    return a


def _fused_sum_matrix_and_rinv(h, w, oh, ow):
    """S = kron(Sh, Sw) (OH*OW, H*W) of 0/1, and per-row reciprocal counts."""
    s = np.kron(_sum_matrix(h, oh), _sum_matrix(w, ow))
    rinv = (1.0 / s.sum(axis=1, keepdims=True)).astype(np.float32)  # (OH*OW, 1)
    return s, rinv


# ----------------------------------------------------------------------------
# Pallas kernel: K-tiled sum-matmul + reciprocal-count epilogue.
# ----------------------------------------------------------------------------
def _adaptive_pool_kernel(x_ref, s_ref, rinv_ref, ot_ref, acc_ref, *, mm_dtype):
    # x_ref   : (TB, TK)     block of flattened planes (int8 / bf16 / f32)
    # s_ref   : (OH*OW, TK)  0/1 summation matrix block (mm_dtype)
    # rinv_ref: (OH*OW, 1)   reciprocal window counts, float32
    # ot_ref  : (OH*OW, TB)  transposed output block (lane-dense)
    # acc_ref : (OH*OW, TB)  float32 accumulator scratch
    k = pl.program_id(1)

    @pl.when(k == 0)
    def _init():
        acc_ref[...] = jnp.zeros_like(acc_ref)

    x = x_ref[...].astype(mm_dtype)  # VPU cast, hidden under the DMA
    # out^T += S @ x^T : contract both operands on their last (H*W) axis (MXU).
    acc_ref[...] += jax.lax.dot_general(
        s_ref[...], x, (((1,), (1,)), ((), ())),
        preferred_element_type=jnp.float32)

    @pl.when(k == pl.num_programs(1) - 1)
    def _finalize():
        # sums -> averages on the VPU, then a lane-dense store.
        ot_ref[...] = (acc_ref[...] * rinv_ref[...]).astype(ot_ref.dtype)


def _pool_transposed(x4d, oh, ow, out_dt):
    """Pool an NCHW tensor; returns the transposed (OH*OW, N*C) result."""
    n, c, h, w = x4d.shape
    b, hw, ohw = n * c, h * w, oh * ow
    in_dt = np.dtype(x4d.dtype)
    in_sz = in_dt.itemsize
    out_sz = np.dtype(out_dt).itemsize

    # MXU operand dtype: bf16 is exact for int8 codes and bf16 activations and
    # is single-pass on the MXU; f32 activations stay f32 (3-pass) for accuracy.
    # TODO(synk): on v5e/v6e an int8 x int8 -> int32 MXU path would be faster
    # still for the quantized-codes case (v7x dropped integer MXU modes).
    if in_dt == np.dtype(jnp.bfloat16) or (
            np.issubdtype(in_dt, np.integer) and in_sz == 1):
        mm_dtype = jnp.bfloat16
    else:
        mm_dtype = jnp.float32
    mm_sz = np.dtype(mm_dtype).itemsize

    # ---- plane-block (lane) size ------------------------------------------
    tb_target = 1024 if _BIG_VMEM else 512
    tb = max(128, min(tb_target, _round_up(b, 128)))
    # v7x megacore: guarantee >=2 steps on the "parallel" axis so both
    # TensorCores get work (single-TC chips only pay one extra ~0.35us step).
    if (not _BIG_VMEM) and b > 128:
        tb = min(tb, _round_up(-(-b // 2), 128))
    nb = -(-b // tb)

    # ---- contraction (H*W) tile size: bounds VMEM independent of plane size
    x_budget = (20 if _BIG_VMEM else 6) * 1024 * 1024
    per_col = tb * (2 * in_sz + mm_sz) + 2 * ohw * mm_sz
    tk_max = max(128, (x_budget // max(per_col, 1)) // 128 * 128)

    s_np, rinv_np = _fused_sum_matrix_and_rinv(h, w, oh, ow)

    if hw <= tk_max:
        tk, nk, hw_pad = hw, 1, hw
    else:
        tk = 0
        for cand in range(tk_max, 127, -128):  # largest mult-of-128 divisor
            if hw % cand == 0:
                tk = cand
                break
        if tk:
            nk, hw_pad = hw // tk, hw
        else:
            tk = tk_max
            hw_pad = _round_up(hw, tk)
            nk = hw_pad // tk
            s_np = np.pad(s_np, ((0, 0), (0, hw_pad - hw)))  # zero coeffs

    x_flat = x4d.reshape(b, hw)  # metadata-only reshape
    if hw_pad != hw:
        # TODO(synk): zero-padding costs one extra HBM copy; only hit for very
        # large planes whose H*W has no multiple-of-128 divisor <= tk_max.
        x_flat = jnp.pad(x_flat, ((0, 0), (0, hw_pad - hw)))

    s_mat = jnp.asarray(s_np, dtype=mm_dtype)  # 0/1 -> exact in bf16
    rinv = jnp.asarray(rinv_np)                # (OH*OW, 1) f32

    # ---- VMEM accounting & per-generation limit ----------------------------
    needed = (2 * tb * tk * in_sz          # double-buffered x blocks
              + tb * tk * mm_sz            # in-kernel cast copy of x
              + 2 * ohw * tk * mm_sz       # S blocks (re-fetch elided when constant)
              + 2 * ohw * tb * out_sz      # double-buffered output blocks
              + ohw * tb * 4               # f32 accumulator scratch
              + 4 * ohw)                   # reciprocal counts
    headroom = (20 if _BIG_VMEM else 12) * 1024 * 1024
    vmem_limit = int(min(max(32 * 1024 * 1024, _VMEM_CAPACITY - headroom),
                         max(32 * 1024 * 1024, 2 * needed)))

    kern = functools.partial(_adaptive_pool_kernel, mm_dtype=mm_dtype)
    out_t = pl.pallas_call(
        kern,
        out_shape=jax.ShapeDtypeStruct((ohw, b), out_dt),
        grid_spec=pltpu.PrefetchScalarGridSpec(
            num_scalar_prefetch=0,
            grid=(nb, nk),                                     # planes, then K
            in_specs=[
                pl.BlockSpec((tb, tk), lambda i, k: (i, k)),   # x plane block
                pl.BlockSpec((ohw, tk), lambda i, k: (0, k)),  # summation matrix
                pl.BlockSpec((ohw, 1), lambda i, k: (0, 0)),   # 1/count column
            ],
            out_specs=pl.BlockSpec((ohw, tb), lambda i, k: (0, i)),
            scratch_shapes=[pltpu.VMEM((ohw, tb), jnp.float32)],
        ),
        compiler_params=pltpu.CompilerParams(
            dimension_semantics=("parallel", "arbitrary"),
            vmem_limit_bytes=vmem_limit,
        ),
        cost_estimate=pl.CostEstimate(
            flops=2 * b * hw * ohw,
            transcendentals=0,
            bytes_accessed=(b * hw_pad * in_sz + nb * ohw * hw_pad * mm_sz
                            + b * ohw * out_sz),
        ),
    )(x_flat, s_mat, rinv)
    return out_t


@functools.partial(jax.jit, static_argnums=(1, 2))
def adaptive_avg_pool2d(x: jax.Array, output_size, out_dtype=None) -> jax.Array:
    """Adaptive average pool over an NCHW tensor using a Pallas TPU kernel."""
    oh, ow = _resolve_output_size(output_size)
    n, c, _, _ = x.shape
    out_dt = x.dtype if out_dtype is None else out_dtype
    out_t = _pool_transposed(x, oh, ow, out_dt)
    # (OH*OW, B) -> (N, C, OH, OW); the output is tiny compared to the input.
    return out_t.T.reshape(n, c, oh, ow)


@functools.partial(jax.jit, static_argnums=(3,))
def _quantized_pool_fused(q_codes, s, z, output_size):
    """Pool int8 codes once; fused round/scale epilogue on the (OH*OW, B) layout."""
    oh, ow = _resolve_output_size(output_size)
    n, c, _, _ = q_codes.shape
    pooled_t = _pool_transposed(q_codes, oh, ow, jnp.float32)   # (OH*OW, N*C)
    q_t = jnp.round(pooled_t).astype(jnp.int8)  # round-half-even == torch.round
    s_f = jnp.asarray(s).astype(jnp.float32)
    z_f = jnp.asarray(z).astype(jnp.float32)
    # dequantize is affine (s*(q-z)) and pooling is linear, so the pooled
    # "real" tensor is recovered without a second HBM pass.
    real_t = s_f * (pooled_t - z_f)
    deq_t = s_f * (q_t.astype(jnp.float32) - z_f)
    r_t = real_t - jax.lax.stop_gradient(real_t - deq_t)        # STE
    q_out = q_t.T.reshape(n, c, oh, ow)
    r_out = r_t.T.reshape(n, c, oh, ow)
    return q_out, r_out


# ----------------------------------------------------------------------------
# Module-equivalent wrappers
# ----------------------------------------------------------------------------
class QuantizedTensor:
    """JAX mirror of the PyTorch QuantizedTensor container."""

    def __init__(self, q, s, z, r=None):
        self.q, self.s, self.z, self.r = q, s, z, r

    def dequantize(self):
        if self.r is not None:
            return self.r
        z = jnp.asarray(self.z).astype(jnp.int32)
        return jnp.asarray(self.s) * (self.q.astype(jnp.int32) - z).astype(jnp.float32)


class QuantizedAdaptiveAvgPool2d:
    """Forward-pass-only JAX/Pallas equivalent of the PyTorch module."""

    def __init__(self, output_size):
        self.output_size = _resolve_output_size(output_size)
        self.activation_quantization = False
        # Buffers from QuantizedOperator.__init__ (deterministic init).
        self.momentum = 0.1
        self.running_min = jnp.zeros((1,), jnp.float32)
        self.running_max = jnp.zeros((1,), jnp.float32)
        self.num_batches_tracked = jnp.array(0, jnp.int32)
        # TODO(synk): training-time running-min/max EMA updates
        # (update_min_max_stats) are host-side buffer bookkeeping outside the
        # forward hot path; omitted here.

    def _activation_quantized_forward(self, inp: "QuantizedTensor") -> "QuantizedTensor":
        if inp.r is None:
            q, r = _quantized_pool_fused(inp.q, jnp.asarray(inp.s, jnp.float32),
                                         jnp.asarray(inp.z), self.output_size)
            return QuantizedTensor(q, inp.s, inp.z, r)
        # Rare path: a carried "real" tensor must be pooled separately.
        q_pooled = adaptive_avg_pool2d(inp.q, self.output_size, jnp.float32)
        q = jnp.round(q_pooled).astype(jnp.int8)
        real = adaptive_avg_pool2d(inp.r, self.output_size, None)
        deq = jnp.asarray(inp.s) * (q.astype(jnp.float32)
                                    - jnp.asarray(inp.z).astype(jnp.float32))
        r = real - jax.lax.stop_gradient(real - deq)
        return QuantizedTensor(q, inp.s, inp.z, r)

    def __call__(self, inp):
        if self.activation_quantization:
            assert isinstance(inp, QuantizedTensor)
            return self._activation_quantized_forward(inp)
        return adaptive_avg_pool2d(inp, self.output_size, None)


# ----------------------------------------------------------------------------
# Host (numpy) reference for verification.
# ----------------------------------------------------------------------------
def _avg_matrix_np(in_size, out_size):
    a = _sum_matrix(in_size, out_size)
    return a / a.sum(axis=1, keepdims=True)


def _ref_adaptive_avg_pool2d_np(x: np.ndarray, output_size) -> np.ndarray:
    oh, ow = _resolve_output_size(output_size)
    ah = _avg_matrix_np(x.shape[2], oh)
    aw = _avg_matrix_np(x.shape[3], ow)
    return np.einsum("oh,nchw,pw->ncop", ah, x.astype(np.float32), aw)


if __name__ == "__main__":
    key = jax.random.PRNGKey(0)
    N, C, H, W = 2, 4, 16, 16
    output_size = (4, 4)

    x = jax.random.normal(key, (N, C, H, W), dtype=jnp.float32)
    module = QuantizedAdaptiveAvgPool2d(output_size)

    # ---- default (float) forward path ----
    out = jax.block_until_ready(module(x))
    ref = _ref_adaptive_avg_pool2d_np(np.asarray(x), output_size)
    np.testing.assert_allclose(np.asarray(out), ref, rtol=1e-4, atol=1e-4)
    assert out.shape == (N, C, 4, 4) and out.dtype == x.dtype

    # ---- activation-quantized forward path ----
    s = jnp.array(0.05, jnp.float32)
    z = jnp.array(3, jnp.int8)
    q = jax.random.randint(jax.random.PRNGKey(1), (N, C, H, W), -128, 128).astype(jnp.int8)
    module.activation_quantization = True
    qout = module(QuantizedTensor(q, s, z))
    jax.block_until_ready(qout.r)
    assert qout.q.shape == (N, C, 4, 4) and qout.q.dtype == jnp.int8

    q_pooled_ref = _ref_adaptive_avg_pool2d_np(np.asarray(q, np.float32), output_size)
    q_ref = np.round(q_pooled_ref).astype(np.int8)
    q_kernel = np.asarray(qout.q).astype(np.int32)
    # codes should match exactly; allow off-by-one only on exact rounding ties
    assert np.abs(q_kernel - q_ref.astype(np.int32)).max() <= 1
    # STE forward value equals the dequantized simulated output
    z_f = float(np.asarray(z))
    r_expected = float(np.asarray(s)) * (q_kernel.astype(np.float32) - z_f)
    np.testing.assert_allclose(np.asarray(qout.r), r_expected, rtol=1e-5, atol=1e-5)

    print("KERNEL_OK")
</pallas_src>

<mosaic_0001>
module attributes {stable_mosaic.version = 11 : i64} {
  func.func @_adaptive_pool_kernel(%arg0: i32, %arg1: i32, %arg2: memref<128x256xf32, #tpu.memory_space<vmem>>, %arg3: memref<16x256xf32, #tpu.memory_space<vmem>>, %arg4: memref<16x1xf32, #tpu.memory_space<vmem>>, %arg5: memref<16x128xf32, #tpu.memory_space<vmem>>, %arg6: memref<16x128xf32, #tpu.memory_space<vmem>>) attributes {dimension_semantics = [#tpu.dimension_semantics<parallel>, #tpu.dimension_semantics<arbitrary>], iteration_bounds = array<i64: 1, 1>, scalar_prefetch = 0 : i64, scratch_operands = 1 : i64, tpu.core_type = #tpu.core_type<tc>, window_params = [{transform_indices = @transform_0, window_bounds = array<i64: 128, 256>}, {transform_indices = @transform_1, window_bounds = array<i64: 16, 256>}, {pipeline_mode = #tpu.pipeline_mode<synchronous>, transform_indices = @transform_2, window_bounds = array<i64: 16, 1>}, {transform_indices = @transform_3, window_bounds = array<i64: 16, 128>}]} {
    %c0_i32 = arith.constant 0 : i32
    %0 = arith.cmpi eq, %arg1, %c0_i32 : i32
    %1 = arith.extui %0 : i1 to i32
    %c0_i32_0 = arith.constant 0 : i32
    %2 = arith.cmpi ne, %1, %c0_i32_0 : i32
    scf.if %2 {
      %cst_10 = arith.constant 0.000000e+00 : f32
      %12 = vector.broadcast %cst_10 : f32 to vector<16x128xf32>
      %c0_11 = arith.constant 0 : index
      %c0_12 = arith.constant 0 : index
      %13 = vector.load %arg6[%c0_11, %c0_12] : memref<16x128xf32, #tpu.memory_space<vmem>>, vector<16x128xf32>
      tpu.vector_store %arg6[%c0_11, %c0_12], %12 {strides = array<i32>} : memref<16x128xf32, #tpu.memory_space<vmem>>, vector<16x128xf32>,
    } else {
    }
    %c0 = arith.constant 0 : index
    %c0_1 = arith.constant 0 : index
    %3 = vector.load %arg2[%c0, %c0_1] : memref<128x256xf32, #tpu.memory_space<vmem>>, vector<128x256xf32>
    %c0_2 = arith.constant 0 : index
    %c0_3 = arith.constant 0 : index
    %4 = vector.load %arg6[%c0_2, %c0_3] : memref<16x128xf32, #tpu.memory_space<vmem>>, vector<16x128xf32>
    %c0_4 = arith.constant 0 : index
    %c0_5 = arith.constant 0 : index
    %5 = vector.load %arg3[%c0_4, %c0_5] : memref<16x256xf32, #tpu.memory_space<vmem>>, vector<16x256xf32>
    %cst = arith.constant dense<0.000000e+00> : vector<16x128xf32>
    %6 = tpu.matmul %5, %3, %cst {dimension_numbers = #tpu.dot_dimension_numbers<[1], [1], [0], [0], [0, 0, 1, 0], [], []>} : vector<16x256xf32>, vector<128x256xf32>, vector<16x128xf32> -> vector<16x128xf32>
    %7 = arith.addf %4, %6 : vector<16x128xf32>
    %c0_6 = arith.constant 0 : index
    %c0_7 = arith.constant 0 : index
    %8 = vector.load %arg6[%c0_6, %c0_7] : memref<16x128xf32, #tpu.memory_space<vmem>>, vector<16x128xf32>
    tpu.vector_store %arg6[%c0_6, %c0_7], %7 {strides = array<i32>} : memref<16x128xf32, #tpu.memory_space<vmem>>, vector<16x128xf32>,
    %c0_i32_8 = arith.constant 0 : i32
    %9 = arith.cmpi eq, %arg1, %c0_i32_8 : i32
    %10 = arith.extui %9 : i1 to i32
    %c0_i32_9 = arith.constant 0 : i32
    %11 = arith.cmpi ne, %10, %c0_i32_9 : i32
    scf.if %11 {
      %c0_10 = arith.constant 0 : index
      %c0_11 = arith.constant 0 : index
      %12 = vector.load %arg6[%c0_10, %c0_11] : memref<16x128xf32, #tpu.memory_space<vmem>>, vector<16x128xf32>
      %c0_12 = arith.constant 0 : index
      %c0_13 = arith.constant 0 : index
      %13 = vector.load %arg4[%c0_12, %c0_13] : memref<16x1xf32, #tpu.memory_space<vmem>>, vector<16x1xf32>
      %14 = vector.broadcast %13 : vector<16x1xf32> to vector<16x128xf32>
      %15 = arith.mulf %12, %14 : vector<16x128xf32>
      %c0_14 = arith.constant 0 : index
      %c0_15 = arith.constant 0 : index
      %16 = vector.load %arg5[%c0_14, %c0_15] : memref<16x128xf32, #tpu.memory_space<vmem>>, vector<16x128xf32>
      tpu.vector_store %arg5[%c0_14, %c0_15], %15 {strides = array<i32>} : memref<16x128xf32, #tpu.memory_space<vmem>>, vector<16x128xf32>,
    } else {
    }
    return
  }
  func.func @transform_0(%arg0: i32, %arg1: i32) -> (i32, i32) {
    %c0_i32 = arith.constant 0 : i32
    return %arg0, %arg1 : i32, i32
  }
  func.func @transform_1(%arg0: i32, %arg1: i32) -> (i32, i32) {
    %c0_i32 = arith.constant 0 : i32
    %c0_i32_0 = arith.constant 0 : i32
    return %c0_i32, %arg1 : i32, i32
  }
  func.func @transform_2(%arg0: i32, %arg1: i32) -> (i32, i32) {
    %c0_i32 = arith.constant 0 : i32
    %c0_i32_0 = arith.constant 0 : i32
    %c0_i32_1 = arith.constant 0 : i32
    return %c0_i32, %c0_i32_0 : i32, i32
  }
  func.func @transform_3(%arg0: i32, %arg1: i32) -> (i32, i32) {
    %c0_i32 = arith.constant 0 : i32
    %c0_i32_0 = arith.constant 0 : i32
    return %c0_i32, %arg0 : i32, i32
  }
}

</mosaic_0001>

<llo_original>
// kernel: adaptive_avg_pool2d.1
$region0: #{adaptive_avg_pool2d.1}
  #allocation0 [shape = 'u32[]', space=smem, size = 0x4, offset = 0x4, fixed_abs, tag = 'smem constant byte address 0x4 - core index']
  #allocation1 [shape = 'u32[144,128]{1,0:T(1,128)}', space=vmem, size = 0x12000, scoped, tag = 'internal scratch']
  #allocation2 [shape = 'f32[16,128]{1,0:T(8,128)}', space=vmem, size = 0x2000, scoped, tag = 'scratch operand']
  %s0 = inlined_call_operand.vmem [shape: f32[8,256], index: 0, kind: input, shape index: {}]
  %s1 = inlined_call_operand.vmem [shape: f32[16,256], index: 1, kind: input, shape index: {}]
  %s2 = inlined_call_operand.vmem [shape: f32[16,1], index: 2, kind: input, shape index: {}]
  %s3 = inlined_call_operand.vmem [shape: f32[16,8], index: 3, kind: output, shape index: {}]
  %s4 = sld [smem:[#allocation0]]
  $region30: #{adaptive_avg_pool2d.1} parent=0
    _
  %s6 = ssub.s32 1, %s4
  %s7 = scalar_select 0, %s6, %s4
  // Predicated region
  $region2: #{adaptive_avg_pool2d.1} parent=0 // pred_check
    _
  $region3: #{adaptive_avg_pool2d.1} parent=0 // pred_check_branch
    %9 = sbr.rel (0) target = $region5
  $region4: #{adaptive_avg_pool2d.1} parent=0 // pred_region
    _
  $region5: #{adaptive_avg_pool2d.1} parent=0 // pred_fallthru
    _
  // Predicated region
  $region6: #{adaptive_avg_pool2d.1} parent=0 // pred_check
    _
  $region7: #{adaptive_avg_pool2d.1} parent=0 // pred_check_branch
    %11 = sbr.rel (0) target = $region9
  $region8: #{adaptive_avg_pool2d.1} parent=0 // pred_region
    _
  $region9: #{adaptive_avg_pool2d.1} parent=0 // pred_fallthru
    _
  // Predicated region
  $region10: #{adaptive_avg_pool2d.1} parent=0 // pred_check
    _
  $region11: #{adaptive_avg_pool2d.1} parent=0 // pred_check_branch
    %13 = sbr.rel (0) target = $region13
  $region12: #{adaptive_avg_pool2d.1} parent=0 // pred_region
    _
  $region13: #{adaptive_avg_pool2d.1} parent=0 // pred_fallthru
    _
  %p14 = scmp.eq.s32.totalorder 0, 0
  // Predicated region
  $region14: #{adaptive_avg_pool2d.1} parent=0 // pred_check
    %p15 = pneg %p14
  $region15: #{adaptive_avg_pool2d.1} parent=0 // pred_check_branch
    %17 = sbr.rel (%p15) target = $region17
  $region16: #{adaptive_avg_pool2d.1} parent=0 // pred_region
    %18 = vst [vmem:[#allocation2] sm:$0xff] 0.0
    %19 = vst [vmem:[#allocation2 + $0x8] sm:$0xff] 0.0
  $region17: #{adaptive_avg_pool2d.1} parent=0 // pred_fallthru
    _
  %v20 = vld [vmem:[%s0] sm:$0xff]
  %v21 = vld [vmem:[%s0 + $0x8] sm:$0xff]
  %v22 = vld [vmem:[%s0 + $0x10] sm:$0xff]
  %v23 = vld [vmem:[%s0 + $0x18] sm:$0xff]
  %v24 = vld [vmem:[%s0 + $0x20] sm:$0xff]
  %v25 = vld [vmem:[%s0 + $0x28] sm:$0xff]
  %v26 = vld [vmem:[%s0 + $0x30] sm:$0xff]
  %v27 = vld [vmem:[%s0 + $0x38] sm:$0xff]
  %v28 = vld [vmem:[%s0 + $0x40] sm:$0xff]
  %v29 = vld [vmem:[%s0 + $0x48] sm:$0xff]
  %v30 = vld [vmem:[%s0 + $0x50] sm:$0xff]
  %v31 = vld [vmem:[%s0 + $0x58] sm:$0xff]
  %v32 = vld [vmem:[%s0 + $0x60] sm:$0xff]
  %v33 = vld [vmem:[%s0 + $0x68] sm:$0xff]
  %v34 = vld [vmem:[%s0 + $0x70] sm:$0xff]
  %v35 = vld [vmem:[%s0 + $0x78] sm:$0xff]
  %v36 = vld [vmem:[%s0 + $0x80] sm:$0xff]
  %v37 = vld [vmem:[%s0 + $0x88] sm:$0xff]
  %v38 = vld [vmem:[%s0 + $0x90] sm:$0xff]
  %v39 = vld [vmem:[%s0 + $0x98] sm:$0xff]
  %v40 = vld [vmem:[%s0 + $0xa0] sm:$0xff]
  %v41 = vld [vmem:[%s0 + $0xa8] sm:$0xff]
  %v42 = vld [vmem:[%s0 + $0xb0] sm:$0xff]
  %v43 = vld [vmem:[%s0 + $0xb8] sm:$0xff]
  %v44 = vld [vmem:[%s0 + $0xc0] sm:$0xff]
  %v45 = vld [vmem:[%s0 + $0xc8] sm:$0xff]
  %v46 = vld [vmem:[%s0 + $0xd0] sm:$0xff]
  %v47 = vld [vmem:[%s0 + $0xd8] sm:$0xff]
  %v48 = vld [vmem:[%s0 + $0xe0] sm:$0xff]
  %v49 = vld [vmem:[%s0 + $0xe8] sm:$0xff]
  %v50 = vld [vmem:[%s0 + $0xf0] sm:$0xff]
  %v51 = vld [vmem:[%s0 + $0xf8] sm:$0xff]
  %v52 = vld [vmem:[#allocation2] sm:$0xff]
  %v53 = vld [vmem:[#allocation2 + $0x8] sm:$0xff]
  %v54 = vld [vmem:[%s1] sm:$0xff]
  %v55 = vld [vmem:[%s1 + $0x8] sm:$0xff]
  %v56 = vld [vmem:[%s1 + $0x10] sm:$0xff]
  %v57 = vld [vmem:[%s1 + $0x18] sm:$0xff]
  %58 = vmatprep.subr.mxu0 %v51
  %59 = vmatpush1.xpose.msra.mxu0 %v50
  %60 = vmatprep.subr.mxu0 %v49
  %61 = vmatpush1.xpose.msra.mxu0 %v48
  %62 = vmatprep.subr.mxu0 %v47
  %63 = vmatpush1.xpose.msra.mxu0 %v46
  %64 = vmatprep.subr.mxu0 %v45
  %65 = vmatpush1.xpose.msra.mxu0 %v44
  %66 = vmatprep.subr.mxu0 %v43
  %67 = vmatpush1.xpose.msra.mxu0 %v42
  %68 = vmatprep.subr.mxu0 %v41
  %69 = vmatpush1.xpose.msra.mxu0 %v40
  %70 = vmatprep.subr.mxu0 %v39
  %71 = vmatpush1.xpose.msra.mxu0 %v38
  %72 = vmatprep.subr.mxu0 %v37
  %73 = vmatpush1.xpose.msra.mxu0 %v36
  %74 = vmatprep.subr.mxu0 %v35
  %75 = vmatpush1.xpose.msra.mxu0 %v34
  %76 = vmatprep.subr.mxu0 %v33
  %77 = vmatpush1.xpose.msra.mxu0 %v32
  %78 = vmatprep.subr.mxu0 %v31
  %79 = vmatpush1.xpose.msra.mxu0 %v30
  %80 = vmatprep.subr.mxu0 %v29
  %81 = vmatpush1.xpose.msra.mxu0 %v28
  %82 = vmatprep.subr.mxu0 %v27
  %83 = vmatpush1.xpose.msra.mxu0 %v26
  %84 = vmatprep.subr.mxu0 %v25
  %85 = vmatpush1.xpose.msra.mxu0 %v24
  %86 = vmatprep.subr.mxu0 %v23
  %87 = vmatpush1.xpose.msra.mxu0 %v22
  %88 = vmatprep.subr.mxu0 %v21
  %89 = vmatpush1.xpose.msra.mxu0 %v20
  %90 = vmatprep.subr.mxu0 0.0
  %91 = vmatpush2.xpose.msra.mxu0 0.0
  %92 = vmatprep.subr.mxu0 0.0
  %93 = vmatpush2.xpose.msra.mxu0 0.0
  %94 = vmatprep.subr.mxu0 0.0
  %95 = vmatpush2.xpose.msra.mxu0 0.0
  %96 = vmatprep.subr.mxu0 0.0
  %97 = vmatpush2.xpose.msra.mxu0 0.0
  %98 = vmatprep.subr.mxu0 0.0
  %99 = vmatpush2.xpose.msra.mxu0 0.0
  %100 = vmatprep.subr.mxu0 0.0
  %101 = vmatpush2.xpose.msra.mxu0 0.0
  %102 = vmatprep.subr.mxu0 0.0
  %103 = vmatpush2.xpose.msra.mxu0 0.0
  %104 = vmatprep.subr.mxu0 0.0
  %105 = vmatpush2.xpose.msra.mxu0 0.0
  %106 = vmatprep.subr.mxu0 0.0
  %107 = vmatpush2.xpose.msra.mxu0 0.0
  %108 = vmatprep.subr.mxu0 0.0
  %109 = vmatpush2.xpose.msra.mxu0 0.0
  %110 = vmatprep.subr.mxu0 0.0
  %111 = vmatpush2.xpose.msra.mxu0 0.0
  %112 = vmatprep.subr.mxu0 0.0
  %113 = vmatpush2.xpose.msra.mxu0 0.0
  %114 = vmatprep.subr.mxu0 0.0
  %115 = vmatpush2.xpose.msra.mxu0 0.0
  %116 = vmatprep.subr.mxu0 0.0
  %117 = vmatpush2.xpose.msra.mxu0 0.0
  %118 = vmatprep.subr.mxu0 0.0
  %119 = vmatpush2.xpose.msra.mxu0 0.0
  %120 = vmatprep.subr.mxu0 0.0
  %121 = vmatpush2.xpose.msra.mxu0 0.0
  %122 = vmatprep.mubr.f32.mxu0 %v55
  %123 = vmatmul.mubr.f32.gmra.mxu0 %v54
  %v124 = vpop.f32.mrf.mxu0
  %v125 = vadd.f32 0.0, %v124
  %v126 = vpop.f32.mrf.mxu0
  %127 = vmatprep.mubr.f32.mxu0 %v57
  %128 = vmatmul.mubr.f32.gmra.mxu0 %v56
  %v129 = vpop.f32.mrf.mxu0
  %v130 = vadd.f32 0.0, %v129
  %v131 = vpop.f32.mrf.mxu0
  %132 = vdwg.mxu0
  %v133 = vadd.f32 %v52, %v125
  %v134 = vadd.f32 %v53, %v130
  %135 = vst [vmem:[#allocation2] sm:$0xff] %v133
  %136 = vst [vmem:[#allocation2 + $0x8] sm:$0xff] %v134
  // Predicated region
  $region18: #{adaptive_avg_pool2d.1} parent=0 // pred_check
    %p137 = pneg %p14
  $region19: #{adaptive_avg_pool2d.1} parent=0 // pred_check_branch
    %139 = sbr.rel (%p137) target = $region21
  $region20: #{adaptive_avg_pool2d.1} parent=0 // pred_region
    %v140 = vld [vmem:[#allocation2] sm:$0xff]
    %v141 = vld [vmem:[#allocation2 + $0x8] sm:$0xff]
    %v142 = vld [vmem:[%s2] sm:$0xff]
    %v143 = vld [vmem:[%s2 + $0x8] sm:$0xff]
    %145 = vset.pattern.permute.xlu0 0
    %146 = vperm.xlu0 %145, %v142
    %v147 = vpop.permute.xlu0 %146
    %150 = vset.pattern.permute.xlu0 0
    %151 = vperm.xlu0 %150, %v143
    %v152 = vpop.permute.xlu0 %151
    %v154 = vmul.f32 %v140, %v147
    %v155 = vmul.f32 %v141, %v152
    %156 = vst [vmem:[%s3] sm:$0xff] %v154
    %157 = vst [vmem:[%s3 + $0x8] sm:$0xff] %v155
  $region21: #{adaptive_avg_pool2d.1} parent=0 // pred_fallthru
    _
  // Predicated region
  $region22: #{adaptive_avg_pool2d.1} parent=0 // pred_check
    _
  $region23: #{adaptive_avg_pool2d.1} parent=0 // pred_check_branch
    %159 = sbr.rel (0) target = $region25
  $region24: #{adaptive_avg_pool2d.1} parent=0 // pred_region
    _
  $region25: #{adaptive_avg_pool2d.1} parent=0 // pred_fallthru
    _
  // Predicated region
  $region26: #{adaptive_avg_pool2d.1} parent=0 // pred_check
    _
  $region27: #{adaptive_avg_pool2d.1} parent=0 // pred_check_branch
    %161 = sbr.rel (0) target = $region29
  $region28: #{adaptive_avg_pool2d.1} parent=0 // pred_region
    _
  $region29: #{adaptive_avg_pool2d.1} parent=0 // pred_fallthru
    _

</llo_original>
